<compile_context>
chip_gen: v5e
topology: v5e:2x2
jax: 0.10.0
libtpu: 0.0.40
codegen_flags: <defaults>
</compile_context>

<pallas_src>
import functools

import jax
import jax.numpy as jnp
from jax.experimental import pallas as pl
from jax.experimental.pallas import tpu as pltpu


def _gcn_kernel(w_ref, adj_ref, x_ref, o_ref, aw_ref):
    # aw = adj_tile @ W, cached per M tile.  Correctness of the cache relies on
    # the N (j) axis being the innermost, in-order ("arbitrary") grid axis: for
    # each i, j runs 0..grid_n-1 before i changes, so recompute only at j == 0.
    @pl.when(pl.program_id(1) == 0)
    def _():
        aw_ref[...] = jnp.dot(
            adj_ref[...], w_ref[...], preferred_element_type=jnp.float32
        ).astype(aw_ref.dtype)

    # out_tile = relu(aw @ x_tile): bf16 MXU operands, f32 accumulation, ReLU
    # in f32 on the accumulator, cast to the output dtype at the store.
    out = jnp.dot(aw_ref[...], x_ref[...], preferred_element_type=jnp.float32)
    o_ref[...] = jnp.maximum(out, 0.0).astype(o_ref.dtype)


def _round_up(x, k):
    return -(-x // k) * k


def _vmem_working_set(tm, tn, f_in, f_out, in_isz, out_isz):
    """Rough per-step VMEM bytes: double-buffered blocks + scratch + f32 temp."""
    w_blk = 2 * _round_up(f_in, 8) * _round_up(f_out, 128) * in_isz
    adj_blk = 2 * _round_up(tm, 8) * _round_up(f_in, 128) * in_isz
    x_blk = 2 * _round_up(f_out, 8) * _round_up(tn, 128) * in_isz
    out_blk = 2 * _round_up(tm, 8) * _round_up(tn, 128) * out_isz
    aw_blk = _round_up(tm, 8) * _round_up(f_out, 128) * in_isz
    tmp_f32 = _round_up(tm, 8) * _round_up(tn, 128) * 4  # dot result pre-cast
    return w_blk + adj_blk + x_blk + out_blk + aw_blk + tmp_f32


_VMEM_BUDGET = 40 * 1024 * 1024  # target working set (fits v7x 64 MiB VMEM)
_VMEM_LIMIT = 48 * 1024 * 1024   # scoped-VMEM limit handed to Mosaic


@functools.partial(
    jax.jit, static_argnames=("tm", "tn", "compute_dtype", "out_dtype")
)
def graph_convolution(weight, x, adj, *, tm=512, tn=2048,
                      compute_dtype=jnp.bfloat16, out_dtype=jnp.float32):
    """GCN layer forward relu(adj @ (weight @ x)), computed as relu((adj@W)@x).

    weight: (F_in, F_out), x: (F_out, N), adj: (M, F_in)  ->  (M, N).
    tm: M tile (multiple of 8); tn: N tile (multiple of 128, lane-dense).
    compute_dtype: MXU operand dtype (bf16 default); accumulation is f32.
    out_dtype: output dtype (f32 default to match the PyTorch module; pass
               jnp.bfloat16 to halve the dominant output HBM writeback if the
               consumer allows it).
    """
    f_in, f_out = weight.shape
    f_out2, n = x.shape
    m, f_in2 = adj.shape
    assert f_out2 == f_out and f_in2 == f_in
    assert tm % 8 == 0 and tn % 128 == 0

    cdt = jnp.dtype(compute_dtype)
    odt = jnp.dtype(out_dtype)

    # bf16 operands: halves adj/x/W DMA + VMEM bytes, native MXU passes.
    w_c = weight.astype(cdt)
    adj_c = adj.astype(cdt)
    x_c = x.astype(cdt)

    # Clamp tiles to array extents (a block equal to the full dim is always
    # legal), then shrink until the double-buffered working set fits VMEM.
    tm_eff = m if m <= tm else tm
    tn_eff = n if n <= tn else tn

    def fits(tm_, tn_):
        return _vmem_working_set(
            tm_, tn_, f_in, f_out, cdt.itemsize, odt.itemsize) <= _VMEM_BUDGET

    while not fits(tm_eff, tn_eff) and tn_eff > 128:
        tn_eff = max(128, (tn_eff // 2) // 128 * 128)
    while not fits(tm_eff, tn_eff) and tm_eff > 8:
        tm_eff = max(8, (tm_eff // 2) // 8 * 8)

    # No wrapper-side padding: Pallas masks the ragged edge blocks (no reduction
    # over M or N, so OOB garbage only reaches masked-off output elements).
    grid = (pl.cdiv(m, tm_eff), pl.cdiv(n, tn_eff))
    grid_m, grid_n = grid

    cost = pl.CostEstimate(
        flops=2 * m * f_in * f_out + 2 * m * f_out * n,
        transcendentals=0,
        bytes_accessed=(
            w_c.size * cdt.itemsize
            + adj_c.size * cdt.itemsize
            # x is re-fetched once per M tile if N is tiled; exactly once when
            # the whole (F_out, N) slab is a single resident block.
            + x_c.size * cdt.itemsize * (grid_m if grid_n > 1 else 1)
            + m * n * odt.itemsize
        ),
    )

    return pl.pallas_call(
        _gcn_kernel,
        out_shape=jax.ShapeDtypeStruct((m, n), odt),
        grid_spec=pltpu.PrefetchScalarGridSpec(
            num_scalar_prefetch=0,
            grid=grid,
            in_specs=[
                pl.BlockSpec((f_in, f_out), lambda i, j: (0, 0)),    # W (whole)
                pl.BlockSpec((tm_eff, f_in), lambda i, j: (i, 0)),   # adj M-tile
                pl.BlockSpec((f_out, tn_eff), lambda i, j: (0, j)),  # x N-tile
            ],
            out_specs=pl.BlockSpec((tm_eff, tn_eff), lambda i, j: (i, j)),
            scratch_shapes=[pltpu.VMEM((tm_eff, f_out), cdt)],       # aw cache
        ),
        compiler_params=pltpu.CompilerParams(
            # M tiles are independent -> "parallel" (2 TCs on v7x, harmless on
            # v5e/v6e).  N MUST stay "arbitrary": the aw scratch cache assumes
            # j iterates in order for each i.
            dimension_semantics=("parallel", "arbitrary"),
            vmem_limit_bytes=_VMEM_LIMIT,
        ),
        cost_estimate=cost,
    )(w_c, adj_c, x_c)


def xavier_uniform(key, shape, dtype=jnp.float32):
    fan_in, fan_out = shape
    limit = (6.0 / (fan_in + fan_out)) ** 0.5
    return jax.random.uniform(key, shape, dtype, minval=-limit, maxval=limit)


if __name__ == "__main__":
    in_features, out_features = 64, 32   # F_in, F_out
    n_cols = 512                         # N: second dim of `input`

    key = jax.random.PRNGKey(0)
    kw, kx, ka = jax.random.split(key, 3)

    weight = xavier_uniform(kw, (in_features, out_features))        # (F_in, F_out)
    x = jax.random.normal(kx, (out_features, n_cols), jnp.float32)  # (F_out, N)

    def make_adj(k, m_rows):
        # deterministic dense "adjacency" (non-negative, row-normalized)
        a = jax.random.uniform(k, (m_rows, in_features), jnp.float32)
        return a / jnp.sum(a, axis=1, keepdims=True)

    def check(out, adj):
        # f32 reference with the original PyTorch association; bf16 MXU
        # operands -> compare with a loose-but-safe tolerance.
        ref = jnp.maximum(adj @ (weight @ x), 0.0)
        assert out.shape == ref.shape and out.dtype == ref.dtype
        err = float(jnp.max(jnp.abs(out - ref)))
        assert jnp.allclose(out, ref, atol=2e-2, rtol=2e-2), err

    # 1) default big tiles -> single (M, N) block, x fully resident, grid (1,1)
    adj_a = make_adj(ka, 256)
    out_a = jax.block_until_ready(graph_convolution(weight, x, adj_a))
    check(out_a, adj_a)

    # 2) forced small tiles + ragged M (250 rows) -> exercises the 2-D grid,
    #    the per-M-tile aw cache (pl.when(j == 0)), and the no-pad masked
    #    edge blocks.
    adj_b = make_adj(jax.random.fold_in(ka, 1), 250)
    out_b = jax.block_until_ready(
        graph_convolution(weight, x, adj_b, tm=128, tn=128))
    check(out_b, adj_b)

    print("KERNEL_OK")
</pallas_src>

<mosaic_0001>
module attributes {stable_mosaic.version = 11 : i64} {
  func.func @_gcn_kernel(%arg0: i32, %arg1: i32, %arg2: memref<64x32xbf16, #tpu.memory_space<vmem>>, %arg3: memref<256x64xbf16, #tpu.memory_space<vmem>>, %arg4: memref<32x512xbf16, #tpu.memory_space<vmem>>, %arg5: memref<256x512xf32, #tpu.memory_space<vmem>>, %arg6: memref<256x32xbf16, #tpu.memory_space<vmem>>) attributes {dimension_semantics = [#tpu.dimension_semantics<parallel>, #tpu.dimension_semantics<arbitrary>], iteration_bounds = array<i64: 1, 1>, scalar_prefetch = 0 : i64, scratch_operands = 1 : i64, tpu.core_type = #tpu.core_type<tc>, window_params = [{pipeline_mode = #tpu.pipeline_mode<synchronous>, transform_indices = @transform_0, window_bounds = array<i64: 64, 32>}, {transform_indices = @transform_1, window_bounds = array<i64: 256, 64>}, {transform_indices = @transform_2, window_bounds = array<i64: 32, 512>}, {transform_indices = @transform_3, window_bounds = array<i64: 256, 512>}]} {
    %c0_i32 = arith.constant 0 : i32
    %0 = arith.cmpi eq, %arg1, %c0_i32 : i32
    %1 = arith.extui %0 : i1 to i32
    %c0_i32_0 = arith.constant 0 : i32
    %2 = arith.cmpi ne, %1, %c0_i32_0 : i32
    scf.if %2 {
      %c0_7 = arith.constant 0 : index
      %c0_8 = arith.constant 0 : index
      %9 = vector.load %arg3[%c0_7, %c0_8] : memref<256x64xbf16, #tpu.memory_space<vmem>>, vector<256x64xbf16>
      %c0_9 = arith.constant 0 : index
      %c0_10 = arith.constant 0 : index
      %10 = vector.load %arg2[%c0_9, %c0_10] : memref<64x32xbf16, #tpu.memory_space<vmem>>, vector<64x32xbf16>
      %cst_11 = arith.constant dense<0.000000e+00> : vector<256x32xf32>
      %11 = tpu.matmul %9, %10, %cst_11 {dimension_numbers = #tpu.dot_dimension_numbers<[1], [0], [0], [1], [0, 0, 1, 1], [], []>} : vector<256x64xbf16>, vector<64x32xbf16>, vector<256x32xf32> -> vector<256x32xf32>
      %12 = arith.truncf %11 : vector<256x32xf32> to vector<256x32xbf16>
      %c0_12 = arith.constant 0 : index
      %c0_13 = arith.constant 0 : index
      %13 = vector.load %arg6[%c0_12, %c0_13] : memref<256x32xbf16, #tpu.memory_space<vmem>>, vector<256x32xbf16>
      tpu.vector_store %arg6[%c0_12, %c0_13], %12 {strides = array<i32>} : memref<256x32xbf16, #tpu.memory_space<vmem>>, vector<256x32xbf16>,
    } else {
    }
    %c0 = arith.constant 0 : index
    %c0_1 = arith.constant 0 : index
    %3 = vector.load %arg6[%c0, %c0_1] : memref<256x32xbf16, #tpu.memory_space<vmem>>, vector<256x32xbf16>
    %c0_2 = arith.constant 0 : index
    %c0_3 = arith.constant 0 : index
    %4 = vector.load %arg4[%c0_2, %c0_3] : memref<32x512xbf16, #tpu.memory_space<vmem>>, vector<32x512xbf16>
    %cst = arith.constant dense<0.000000e+00> : vector<256x512xf32>
    %5 = tpu.matmul %3, %4, %cst {dimension_numbers = #tpu.dot_dimension_numbers<[1], [0], [0], [1], [0, 0, 1, 1], [], []>} : vector<256x32xbf16>, vector<32x512xbf16>, vector<256x512xf32> -> vector<256x512xf32>
    %cst_4 = arith.constant 0.000000e+00 : f32
    %6 = vector.broadcast %cst_4 : f32 to vector<256x512xf32>
    %7 = arith.maximumf %5, %6 : vector<256x512xf32>
    %c0_5 = arith.constant 0 : index
    %c0_6 = arith.constant 0 : index
    %8 = vector.load %arg5[%c0_5, %c0_6] : memref<256x512xf32, #tpu.memory_space<vmem>>, vector<256x512xf32>
    tpu.vector_store %arg5[%c0_5, %c0_6], %7 {strides = array<i32>} : memref<256x512xf32, #tpu.memory_space<vmem>>, vector<256x512xf32>,
    return
  }
  func.func @transform_0(%arg0: i32, %arg1: i32) -> (i32, i32) {
    %c0_i32 = arith.constant 0 : i32
    %c0_i32_0 = arith.constant 0 : i32
    %c0_i32_1 = arith.constant 0 : i32
    return %c0_i32, %c0_i32_0 : i32, i32
  }
  func.func @transform_1(%arg0: i32, %arg1: i32) -> (i32, i32) {
    %c0_i32 = arith.constant 0 : i32
    %c0_i32_0 = arith.constant 0 : i32
    return %arg0, %c0_i32 : i32, i32
  }
  func.func @transform_2(%arg0: i32, %arg1: i32) -> (i32, i32) {
    %c0_i32 = arith.constant 0 : i32
    %c0_i32_0 = arith.constant 0 : i32
    return %c0_i32, %arg1 : i32, i32
  }
  func.func @transform_3(%arg0: i32, %arg1: i32) -> (i32, i32) {
    %c0_i32 = arith.constant 0 : i32
    return %arg0, %arg1 : i32, i32
  }
}

</mosaic_0001>

<llo_original>
// kernel: graph_convolution.1
$region0: #{graph_convolution.1}
  #allocation0 [shape = 'u32[]', space=smem, size = 0x4, offset = 0x4, fixed_abs, tag = 'smem constant byte address 0x4 - core index']
  #allocation1 [shape = 'u32[72,128]{1,0:T(1,128)}', space=vmem, size = 0x9000, scoped, tag = 'internal scratch']
  #allocation2 [shape = 'bf16[256,32]{1,0:T(8,128)(2,1)}', space=vmem, size = 0x10000, scoped, tag = 'scratch operand']
  %s0 = inlined_call_operand.vmem [shape: bf16[64,32], index: 0, kind: input, shape index: {}]
  %s1 = inlined_call_operand.vmem [shape: bf16[256,64], index: 1, kind: input, shape index: {}]
  %s2 = inlined_call_operand.vmem [shape: bf16[32,512], index: 2, kind: input, shape index: {}]
  %s3 = inlined_call_operand.hbm [shape: f32[256,512], index: 3, kind: output, shape index: {}]
  %s4 = sld [smem:[#allocation0]]
  $region26: #{graph_convolution.1} parent=0
    _
  %s6 = ssub.s32 1, %s4
  %s7 = scalar_select 0, %s6, %s4
  $region1: #{graph_convolution.1} parent=0
    #allocation3 [shape = 'u8[524288]{0}', space=vmem, size = 0x80000, scoped, tag = 'output window, operand 0, single buffered']
    #allocation4 [shape = 's32[1]{0}', space=sflag, size = 0x4, scoped, tag = 'scoped memory for graph_convolution.1']
    %8 = vsyncpa [#allocation4], 0
    // Predicated region
    $region2: #{graph_convolution.1} parent=1 // pred_check
      _
    $region3: #{graph_convolution.1} parent=1 // pred_check_branch
      %10 = sbr.rel (0) target = $region5
    $region4: #{graph_convolution.1} parent=1 // pred_region
      _
    $region5: #{graph_convolution.1} parent=1 // pred_fallthru
      _
    // Predicated region
    $region6: #{graph_convolution.1} parent=1 // pred_check
      _
    $region7: #{graph_convolution.1} parent=1 // pred_check_branch
      %12 = sbr.rel (0) target = $region9
    $region8: #{graph_convolution.1} parent=1 // pred_region
      _
    $region9: #{graph_convolution.1} parent=1 // pred_fallthru
      _
    // Predicated region
    $region10: #{graph_convolution.1} parent=1 // pred_check
      _
    $region11: #{graph_convolution.1} parent=1 // pred_check_branch
      %14 = sbr.rel (0) target = $region13
    $region12: #{graph_convolution.1} parent=1 // pred_region
      _
    $region13: #{graph_convolution.1} parent=1 // pred_fallthru
      _
    %p16 = scmp.eq.s32.totalorder 0, 0
    // Predicated region
    $region14: #{graph_convolution.1} parent=1 // pred_check
      %p17 = pneg %p16
    $region15: #{graph_convolution.1} parent=1 // pred_check_branch
      %19 = sbr.rel (%p17) target = $region17
    $region16: #{graph_convolution.1} parent=1 // pred_region
      %v20 = vld [vmem:[%s1] sm:$0xf]
      %v21 = vld [vmem:[%s1 + $0x4] sm:$0xf]
      %v22 = vld [vmem:[%s1 + $0x8] sm:$0xf]
      %v23 = vld [vmem:[%s1 + $0xc] sm:$0xf]
      %v24 = vld [vmem:[%s1 + $0x10] sm:$0xf]
      %v25 = vld [vmem:[%s1 + $0x14] sm:$0xf]
      %v26 = vld [vmem:[%s1 + $0x18] sm:$0xf]
      %v27 = vld [vmem:[%s1 + $0x1c] sm:$0xf]
      %v28 = vld [vmem:[%s1 + $0x20] sm:$0xf]
      %v29 = vld [vmem:[%s1 + $0x24] sm:$0xf]
      %v30 = vld [vmem:[%s1 + $0x28] sm:$0xf]
      %v31 = vld [vmem:[%s1 + $0x2c] sm:$0xf]
      %v32 = vld [vmem:[%s1 + $0x30] sm:$0xf]
      %v33 = vld [vmem:[%s1 + $0x34] sm:$0xf]
      %v34 = vld [vmem:[%s1 + $0x38] sm:$0xf]
      %v35 = vld [vmem:[%s1 + $0x3c] sm:$0xf]
      %v36 = vld [vmem:[%s1 + $0x40] sm:$0xf]
      %v37 = vld [vmem:[%s1 + $0x44] sm:$0xf]
      %v38 = vld [vmem:[%s1 + $0x48] sm:$0xf]
      %v39 = vld [vmem:[%s1 + $0x4c] sm:$0xf]
      %v40 = vld [vmem:[%s1 + $0x50] sm:$0xf]
      %v41 = vld [vmem:[%s1 + $0x54] sm:$0xf]
      %v42 = vld [vmem:[%s1 + $0x58] sm:$0xf]
      %v43 = vld [vmem:[%s1 + $0x5c] sm:$0xf]
      %v44 = vld [vmem:[%s1 + $0x60] sm:$0xf]
      %v45 = vld [vmem:[%s1 + $0x64] sm:$0xf]
      %v46 = vld [vmem:[%s1 + $0x68] sm:$0xf]
      %v47 = vld [vmem:[%s1 + $0x6c] sm:$0xf]
      %v48 = vld [vmem:[%s1 + $0x70] sm:$0xf]
      %v49 = vld [vmem:[%s1 + $0x74] sm:$0xf]
      %v50 = vld [vmem:[%s1 + $0x78] sm:$0xf]
      %v51 = vld [vmem:[%s1 + $0x7c] sm:$0xf]
      %v52 = vld [vmem:[%s0] sm:$0xf]
      %v53 = vld [vmem:[%s0 + $0x4] sm:$0xf]
      %v54 = vld [vmem:[%s0 + $0x8] sm:$0xf]
      %v55 = vld [vmem:[%s0 + $0xc] sm:$0xf]
      %v56 = vld [vmem:[%s0 + $0x10] sm:$0xf]
      %v57 = vld [vmem:[%s0 + $0x14] sm:$0xf]
      %v58 = vld [vmem:[%s0 + $0x18] sm:$0xf]
      %v59 = vld [vmem:[%s0 + $0x1c] sm:$0xf]
      %v92 = vunpack.c.l.b16 %v20
      %v93 = vunpack.c.l.b16 %v21
      %v94 = vunpack.c.l.b16 %v22
      %v95 = vunpack.c.l.b16 %v23
      %v96 = vunpack.c.l.b16 %v24
      %v97 = vunpack.c.l.b16 %v25
      %v98 = vunpack.c.l.b16 %v26
      %v99 = vunpack.c.l.b16 %v27
      %v100 = vunpack.c.l.b16 %v28
      %v101 = vunpack.c.l.b16 %v29
      %v102 = vunpack.c.l.b16 %v30
      %v103 = vunpack.c.l.b16 %v31
      %v104 = vunpack.c.l.b16 %v32
      %v105 = vunpack.c.l.b16 %v33
      %v106 = vunpack.c.l.b16 %v34
      %v107 = vunpack.c.l.b16 %v35
      %v108 = vunpack.c.l.b16 %v36
      %v109 = vunpack.c.l.b16 %v37
      %v110 = vunpack.c.l.b16 %v38
      %v111 = vunpack.c.l.b16 %v39
      %v112 = vunpack.c.l.b16 %v40
      %v113 = vunpack.c.l.b16 %v41
      %v114 = vunpack.c.l.b16 %v42
      %v115 = vunpack.c.l.b16 %v43
      %v116 = vunpack.c.l.b16 %v44
      %v117 = vunpack.c.l.b16 %v45
      %v118 = vunpack.c.l.b16 %v46
      %v119 = vunpack.c.l.b16 %v47
      %v120 = vunpack.c.l.b16 %v48
      %v121 = vunpack.c.l.b16 %v49
      %v122 = vunpack.c.l.b16 %v50
      %v123 = vunpack.c.l.b16 %v51
      %v124 = vpack.c.b16 %v93, %v92
      %v125 = vpack.c.b16 %v95, %v94
      %v126 = vpack.c.b16 %v97, %v96
      %v127 = vpack.c.b16 %v99, %v98
      %v128 = vpack.c.b16 %v101, %v100
      %v129 = vpack.c.b16 %v103, %v102
      %v130 = vpack.c.b16 %v105, %v104
      %v131 = vpack.c.b16 %v107, %v106
      %v132 = vpack.c.b16 %v109, %v108
      %v133 = vpack.c.b16 %v111, %v110
      %v134 = vpack.c.b16 %v113, %v112
      %v135 = vpack.c.b16 %v115, %v114
      %v136 = vpack.c.b16 %v117, %v116
      %v137 = vpack.c.b16 %v119, %v118
      %v138 = vpack.c.b16 %v121, %v120
      %v139 = vpack.c.b16 %v123, %v122
      %v148 = vunpack.c.l.b16 %v52
      %v149 = vunpack.c.l.b16 %v53
      %v150 = vunpack.c.l.b16 %v54
      %v151 = vunpack.c.l.b16 %v55
      %v152 = vunpack.c.l.b16 %v56
      %v153 = vunpack.c.l.b16 %v57
      %v154 = vunpack.c.l.b16 %v58
      %v155 = vunpack.c.l.b16 %v59
      %v156 = vpack.c.b16 %v149, %v148
      %v157 = vpack.c.b16 %v151, %v150
      %v158 = vpack.c.b16 %v153, %v152
      %v159 = vpack.c.b16 %v155, %v154
      %vm164 = vcmask 523264
      %v166 = vsel %vm164, %v124, 0
      %v169 = vsel %vm164, %v125, 0
      %v172 = vsel %vm164, %v126, 0
      %v175 = vsel %vm164, %v127, 0
      %v178 = vsel %vm164, %v128, 0
      %v181 = vsel %vm164, %v129, 0
      %v184 = vsel %vm164, %v130, 0
      %v187 = vsel %vm164, %v131, 0
      %v190 = vsel %vm164, %v132, 0
      %v193 = vsel %vm164, %v133, 0
      %v196 = vsel %vm164, %v134, 0
      %v199 = vsel %vm164, %v135, 0
      %v202 = vsel %vm164, %v136, 0
      %v205 = vsel %vm164, %v137, 0
      %v208 = vsel %vm164, %v138, 0
      %v211 = vsel %vm164, %v139, 0
      %213 = vmatpush.bf16.msra.mxu0 0
      %214 = vmatpush.bf16.msra.mxu0 0
      %215 = vmatpush.bf16.msra.mxu0 0
      %216 = vmatpush.bf16.msra.mxu0 0
      %217 = vmatpush.bf16.msra.mxu0 %v159
      %218 = vmatpush.bf16.msra.mxu0 %v158
      %219 = vmatpush.bf16.msra.mxu0 %v157
      %220 = vmatpush.bf16.msra.mxu0 %v156
      %221 = vmatmul.bf16.gmra.mxu0 %v166
      %v222 = vpop.f32.mrf.mxu0
      %v223 = vadd.f32 0.0, %v222
      %v224 = vpop.f32.mrf.mxu0
      %v225 = vadd.f32 0.0, %v224
      %226 = vmatmul.bf16.gmra.mxu0 %v169
      %v227 = vpop.f32.mrf.mxu0
      %v228 = vadd.f32 0.0, %v227
      %v229 = vpop.f32.mrf.mxu0
      %v230 = vadd.f32 0.0, %v229
      %231 = vmatmul.bf16.gmra.mxu0 %v172
      %v232 = vpop.f32.mrf.mxu0
      %v233 = vadd.f32 0.0, %v232
      %v234 = vpop.f32.mrf.mxu0
      %v235 = vadd.f32 0.0, %v234
      %236 = vmatmul.bf16.gmra.mxu0 %v175
      %v237 = vpop.f32.mrf.mxu0
      %v238 = vadd.f32 0.0, %v237
      %v239 = vpop.f32.mrf.mxu0
      %v240 = vadd.f32 0.0, %v239
      %241 = vmatmul.bf16.gmra.mxu0 %v178
      %v242 = vpop.f32.mrf.mxu0
      %v243 = vadd.f32 0.0, %v242
      %v244 = vpop.f32.mrf.mxu0
      %v245 = vadd.f32 0.0, %v244
      %246 = vmatmul.bf16.gmra.mxu0 %v181
      %v247 = vpop.f32.mrf.mxu0
      %v248 = vadd.f32 0.0, %v247
      %v249 = vpop.f32.mrf.mxu0
      %v250 = vadd.f32 0.0, %v249
      %251 = vmatmul.bf16.gmra.mxu0 %v184
      %v252 = vpop.f32.mrf.mxu0
      %v253 = vadd.f32 0.0, %v252
      %v254 = vpop.f32.mrf.mxu0
      %v255 = vadd.f32 0.0, %v254
      %256 = vmatmul.bf16.gmra.mxu0 %v187
      %v257 = vpop.f32.mrf.mxu0
      %v258 = vadd.f32 0.0, %v257
      %v259 = vpop.f32.mrf.mxu0
      %v260 = vadd.f32 0.0, %v259
      %261 = vmatmul.bf16.gmra.mxu0 %v190
      %v262 = vpop.f32.mrf.mxu0
      %v263 = vadd.f32 0.0, %v262
      %v264 = vpop.f32.mrf.mxu0
      %v265 = vadd.f32 0.0, %v264
      %266 = vmatmul.bf16.gmra.mxu0 %v193
      %v267 = vpop.f32.mrf.mxu0
      %v268 = vadd.f32 0.0, %v267
      %v269 = vpop.f32.mrf.mxu0
      %v270 = vadd.f32 0.0, %v269
      %271 = vmatmul.bf16.gmra.mxu0 %v196
      %v272 = vpop.f32.mrf.mxu0
      %v273 = vadd.f32 0.0, %v272
      %v274 = vpop.f32.mrf.mxu0
      %v275 = vadd.f32 0.0, %v274
      %276 = vmatmul.bf16.gmra.mxu0 %v199
      %v277 = vpop.f32.mrf.mxu0
      %v278 = vadd.f32 0.0, %v277
      %v279 = vpop.f32.mrf.mxu0
      %v280 = vadd.f32 0.0, %v279
      %281 = vmatmul.bf16.gmra.mxu0 %v202
      %v282 = vpop.f32.mrf.mxu0
      %v283 = vadd.f32 0.0, %v282
      %v284 = vpop.f32.mrf.mxu0
      %v285 = vadd.f32 0.0, %v284
      %286 = vmatmul.bf16.gmra.mxu0 %v205
      %v287 = vpop.f32.mrf.mxu0
      %v288 = vadd.f32 0.0, %v287
      %v289 = vpop.f32.mrf.mxu0
      %v290 = vadd.f32 0.0, %v289
      %291 = vmatmul.bf16.gmra.mxu0 %v208
      %v292 = vpop.f32.mrf.mxu0
      %v293 = vadd.f32 0.0, %v292
      %v294 = vpop.f32.mrf.mxu0
      %v295 = vadd.f32 0.0, %v294
      %296 = vmatmul.bf16.gmra.mxu0 %v211
      %v297 = vpop.f32.mrf.mxu0
      %v298 = vadd.f32 0.0, %v297
      %v299 = vpop.f32.mrf.mxu0
      %v300 = vadd.f32 0.0, %v299
      %301 = vdwg.mxu0
      %v302 = vpack.c.bf16 %v223, %v223
      %v303 = vpack.c.bf16 %v225, %v225
      %v304 = vpack.c.bf16 %v228, %v228
      %v305 = vpack.c.bf16 %v230, %v230
      %v306 = vpack.c.bf16 %v233, %v233
      %v307 = vpack.c.bf16 %v235, %v235
      %v308 = vpack.c.bf16 %v238, %v238
      %v309 = vpack.c.bf16 %v240, %v240
      %v310 = vpack.c.bf16 %v243, %v243
      %v311 = vpack.c.bf16 %v245, %v245
      %v312 = vpack.c.bf16 %v248, %v248
      %v313 = vpack.c.bf16 %v250, %v250
      %v314 = vpack.c.bf16 %v253, %v253
      %v315 = vpack.c.bf16 %v255, %v255
      %v316 = vpack.c.bf16 %v258, %v258
      %v317 = vpack.c.bf16 %v260, %v260
      %v318 = vpack.c.bf16 %v263, %v263
      %v319 = vpack.c.bf16 %v265, %v265
      %v320 = vpack.c.bf16 %v268, %v268
      %v321 = vpack.c.bf16 %v270, %v270
      %v322 = vpack.c.bf16 %v273, %v273
      %v323 = vpack.c.bf16 %v275, %v275
      %v324 = vpack.c.bf16 %v278, %v278
      %v325 = vpack.c.bf16 %v280, %v280
      %v326 = vpack.c.bf16 %v283, %v283
      %v327 = vpack.c.bf16 %v285, %v285
      %v328 = vpack.c.bf16 %v288, %v288
      %v329 = vpack.c.bf16 %v290, %v290
      %v330 = vpack.c.bf16 %v293, %v293
      %v331 = vpack.c.bf16 %v295, %v295
      %v332 = vpack.c.bf16 %v298, %v298
      %v333 = vpack.c.bf16 %v300, %v300
      %vm334 = vcmask 257024
      %335 = vst.msk [vmem:[#allocation2] sm:$0xf] %vm334, %v302
      %336 = vst.msk [vmem:[#allocation2 + $0x4] sm:$0xf] %vm334, %v303
      %337 = vst.msk [vmem:[#allocation2 + $0x8] sm:$0xf] %vm334, %v304
      %338 = vst.msk [vmem:[#allocation2 + $0xc] sm:$0xf] %vm334, %v305
      %339 = vst.msk [vmem:[#allocation2 + $0x10] sm:$0xf] %vm334, %v306
      %340 = vst.msk [vmem:[#allocation2 + $0x14] sm:$0xf] %vm334, %v307
      %341 = vst.msk [vmem:[#allocation2 + $0x18] sm:$0xf] %vm334, %v308
      %342 = vst.msk [vmem:[#allocation2 + $0x1c] sm:$0xf] %vm334, %v309
      %343 = vst.msk [vmem:[#allocation2 + $0x20] sm:$0xf] %vm334, %v310
      %344 = vst.msk [vmem:[#allocation2 + $0x24] sm:$0xf] %vm334, %v311
      %345 = vst.msk [vmem:[#allocation2 + $0x28] sm:$0xf] %vm334, %v312
      %346 = vst.msk [vmem:[#allocation2 + $0x2c] sm:$0xf] %vm334, %v313
      %347 = vst.msk [vmem:[#allocation2 + $0x30] sm:$0xf] %vm334, %v314
      %348 = vst.msk [vmem:[#allocation2 + $0x34] sm:$0xf] %vm334, %v315
      %349 = vst.msk [vmem:[#allocation2 + $0x38] sm:$0xf] %vm334, %v316
      %350 = vst.msk [vmem:[#allocation2 + $0x3c] sm:$0xf] %vm334, %v317
      %351 = vst.msk [vmem:[#allocation2 + $0x40] sm:$0xf] %vm334, %v318
      %352 = vst.msk [vmem:[#allocation2 + $0x44] sm:$0xf] %vm334, %v319
      %353 = vst.msk [vmem:[#allocation2 + $0x48] sm:$0xf] %vm334, %v320
      %354 = vst.msk [vmem:[#allocation2 + $0x4c] sm:$0xf] %vm334, %v321
      %355 = vst.msk [vmem:[#allocation2 + $0x50] sm:$0xf] %vm334, %v322
      %356 = vst.msk [vmem:[#allocation2 + $0x54] sm:$0xf] %vm334, %v323
      %357 = vst.msk [vmem:[#allocation2 + $0x58] sm:$0xf] %vm334, %v324
      %358 = vst.msk [vmem:[#allocation2 + $0x5c] sm:$0xf] %vm334, %v325
      %359 = vst.msk [vmem:[#allocation2 + $0x60] sm:$0xf] %vm334, %v326
      %360 = vst.msk [vmem:[#allocation2 + $0x64] sm:$0xf] %vm334, %v327
      %361 = vst.msk [vmem:[#allocation2 + $0x68] sm:$0xf] %vm334, %v328
      %362 = vst.msk [vmem:[#allocation2 + $0x6c] sm:$0xf] %vm334, %v329
      %363 = vst.msk [vmem:[#allocation2 + $0x70] sm:$0xf] %vm334, %v330
      %364 = vst.msk [vmem:[#allocation2 + $0x74] sm:$0xf] %vm334, %v331
      %365 = vst.msk [vmem:[#allocation2 + $0x78] sm:$0xf] %vm334, %v332
      %366 = vst.msk [vmem:[#allocation2 + $0x7c] sm:$0xf] %vm334, %v333
    $region17: #{graph_convolution.1} parent=1 // pred_fallthru
      _
    %v367 = vld [vmem:[#allocation2] sm:$0xf]
    %v368 = vld [vmem:[#allocation2 + $0x4] sm:$0xf]
    %v369 = vld [vmem:[#allocation2 + $0x8] sm:$0xf]
    %v370 = vld [vmem:[#allocation2 + $0xc] sm:$0xf]
    %v371 = vld [vmem:[#allocation2 + $0x10] sm:$0xf]
    %v372 = vld [vmem:[#allocation2 + $0x14] sm:$0xf]
    %v373 = vld [vmem:[#allocation2 + $0x18] sm:$0xf]
    %v374 = vld [vmem:[#allocation2 + $0x1c] sm:$0xf]
    %v375 = vld [vmem:[#allocation2 + $0x20] sm:$0xf]
    %v376 = vld [vmem:[#allocation2 + $0x24] sm:$0xf]
    %v377 = vld [vmem:[#allocation2 + $0x28] sm:$0xf]
    %v378 = vld [vmem:[#allocation2 + $0x2c] sm:$0xf]
    %v379 = vld [vmem:[#allocation2 + $0x30] sm:$0xf]
    %v380 = vld [vmem:[#allocation2 + $0x34] sm:$0xf]
    %v381 = vld [vmem:[#allocation2 + $0x38] sm:$0xf]
    %v382 = vld [vmem:[#allocation2 + $0x3c] sm:$0xf]
    %v383 = vld [vmem:[#allocation2 + $0x40] sm:$0xf]
    %v384 = vld [vmem:[#allocation2 + $0x44] sm:$0xf]
    %v385 = vld [vmem:[#allocation2 + $0x48] sm:$0xf]
    %v386 = vld [vmem:[#allocation2 + $0x4c] sm:$0xf]
    %v387 = vld [vmem:[#allocation2 + $0x50] sm:$0xf]
    %v388 = vld [vmem:[#allocation2 + $0x54] sm:$0xf]
    %v389 = vld [vmem:[#allocation2 + $0x58] sm:$0xf]
    %v390 = vld [vmem:[#allocation2 + $0x5c] sm:$0xf]
    %v391 = vld [vmem:[#allocation2 + $0x60] sm:$0xf]
    %v392 = vld [vmem:[#allocation2 + $0x64] sm:$0xf]
    %v393 = vld [vmem:[#allocation2 + $0x68] sm:$0xf]
    %v394 = vld [vmem:[#allocation2 + $0x6c] sm:$0xf]
    %v395 = vld [vmem:[#allocation2 + $0x70] sm:$0xf]
    %v396 = vld [vmem:[#allocation2 + $0x74] sm:$0xf]
    %v397 = vld [vmem:[#allocation2 + $0x78] sm:$0xf]
    %v398 = vld [vmem:[#allocation2 + $0x7c] sm:$0xf]
    %v399 = vld [vmem:[%s2] sm:$0xff]
    %v400 = vld [vmem:[%s2 + $0x8] sm:$0xff]
    %v401 = vld [vmem:[%s2 + $0x10] sm:$0xff]
    %v402 = vld [vmem:[%s2 + $0x18] sm:$0xff]
    %v403 = vld [vmem:[%s2 + $0x20] sm:$0xff]
    %v404 = vld [vmem:[%s2 + $0x28] sm:$0xff]
    %v405 = vld [vmem:[%s2 + $0x30] sm:$0xff]
    %v406 = vld [vmem:[%s2 + $0x38] sm:$0xff]
    %v439 = vunpack.c.l.b16 %v367
    %v440 = vunpack.c.l.b16 %v368
    %v441 = vunpack.c.l.b16 %v369
    %v442 = vunpack.c.l.b16 %v370
    %v443 = vunpack.c.l.b16 %v371
    %v444 = vunpack.c.l.b16 %v372
    %v445 = vunpack.c.l.b16 %v373
    %v446 = vunpack.c.l.b16 %v374
    %v447 = vunpack.c.l.b16 %v375
    %v448 = vunpack.c.l.b16 %v376
    %v449 = vunpack.c.l.b16 %v377
    %v450 = vunpack.c.l.b16 %v378
    %v451 = vunpack.c.l.b16 %v379
    %v452 = vunpack.c.l.b16 %v380
    %v453 = vunpack.c.l.b16 %v381
    %v454 = vunpack.c.l.b16 %v382
    %v455 = vunpack.c.l.b16 %v383
    %v456 = vunpack.c.l.b16 %v384
    %v457 = vunpack.c.l.b16 %v385
    %v458 = vunpack.c.l.b16 %v386
    %v459 = vunpack.c.l.b16 %v387
    %v460 = vunpack.c.l.b16 %v388
    %v461 = vunpack.c.l.b16 %v389
    %v462 = vunpack.c.l.b16 %v390
    %v463 = vunpack.c.l.b16 %v391
    %v464 = vunpack.c.l.b16 %v392
    %v465 = vunpack.c.l.b16 %v393
    %v466 = vunpack.c.l.b16 %v394
    %v467 = vunpack.c.l.b16 %v395
    %v468 = vunpack.c.l.b16 %v396
    %v469 = vunpack.c.l.b16 %v397
    %v470 = vunpack.c.l.b16 %v398
    %v471 = vpack.c.b16 %v440, %v439
    %v472 = vpack.c.b16 %v442, %v441
    %v473 = vpack.c.b16 %v444, %v443
    %v474 = vpack.c.b16 %v446, %v445
    %v475 = vpack.c.b16 %v448, %v447
    %v476 = vpack.c.b16 %v450, %v449
    %v477 = vpack.c.b16 %v452, %v451
    %v478 = vpack.c.b16 %v454, %v453
    %v479 = vpack.c.b16 %v456, %v455
    %v480 = vpack.c.b16 %v458, %v457
    %v481 = vpack.c.b16 %v460, %v459
    %v482 = vpack.c.b16 %v462, %v461
    %v483 = vpack.c.b16 %v464, %v463
    %v484 = vpack.c.b16 %v466, %v465
    %v485 = vpack.c.b16 %v468, %v467
    %v486 = vpack.c.b16 %v470, %v469
    %v495 = vunpack.c.l.b16 %v399
    %v496 = vunpack.c.h.b16 %v399
    %v497 = vunpack.c.l.b16 %v400
    %v498 = vunpack.c.h.b16 %v400
    %v499 = vunpack.c.l.b16 %v401
    %v500 = vunpack.c.h.b16 %v401
    %v501 = vunpack.c.l.b16 %v402
    %v502 = vunpack.c.h.b16 %v402
    %v503 = vunpack.c.l.b16 %v403
    %v504 = vunpack.c.h.b16 %v403
    %v505 = vunpack.c.l.b16 %v404
    %v506 = vunpack.c.h.b16 %v404
    %v507 = vunpack.c.l.b16 %v405
    %v508 = vunpack.c.h.b16 %v405
    %v509 = vunpack.c.l.b16 %v406
    %v510 = vunpack.c.h.b16 %v406
    %v511 = vpack.c.b16 %v499, %v495
    %v512 = vpack.c.b16 %v500, %v496
    %v513 = vpack.c.b16 %v501, %v497
    %v514 = vpack.c.b16 %v502, %v498
    %v515 = vpack.c.b16 %v507, %v503
    %v516 = vpack.c.b16 %v508, %v504
    %v517 = vpack.c.b16 %v509, %v505
    %v518 = vpack.c.b16 %v510, %v506
    %vm527 = vcmask 261120
    %v529 = vsel %vm527, %v471, 0
    %v532 = vsel %vm527, %v472, 0
    %v535 = vsel %vm527, %v473, 0
    %v538 = vsel %vm527, %v474, 0
    %v541 = vsel %vm527, %v475, 0
    %v544 = vsel %vm527, %v476, 0
    %v547 = vsel %vm527, %v477, 0
    %v550 = vsel %vm527, %v478, 0
    %v553 = vsel %vm527, %v479, 0
    %v556 = vsel %vm527, %v480, 0
    %v559 = vsel %vm527, %v481, 0
    %v562 = vsel %vm527, %v482, 0
    %v565 = vsel %vm527, %v483, 0
    %v568 = vsel %vm527, %v484, 0
    %v571 = vsel %vm527, %v485, 0
    %v574 = vsel %vm527, %v486, 0
    %576 = vmatpush.bf16.msra.mxu0 0
    %577 = vmatpush.bf16.msra.mxu0 0
    %578 = vmatpush.bf16.msra.mxu0 0
    %579 = vmatpush.bf16.msra.mxu0 0
    %580 = vmatpush.bf16.msra.mxu0 0
    %581 = vmatpush.bf16.msra.mxu0 0
    %582 = vmatpush.bf16.msra.mxu0 %v515
    %583 = vmatpush.bf16.msra.mxu0 %v511
    %584 = vmatmul.bf16.gmra.mxu0 %v529
    %v585 = vpop.f32.mrf.mxu0
    %v586 = vadd.f32 0.0, %v585
    %v587 = vpop.f32.mrf.mxu0
    %v588 = vadd.f32 0.0, %v587
    %589 = vmatmul.bf16.gmra.mxu0 %v532
    %v590 = vpop.f32.mrf.mxu0
    %v591 = vadd.f32 0.0, %v590
    %v592 = vpop.f32.mrf.mxu0
    %v593 = vadd.f32 0.0, %v592
    %594 = vmatmul.bf16.gmra.mxu0 %v535
    %v595 = vpop.f32.mrf.mxu0
    %v596 = vadd.f32 0.0, %v595
    %v597 = vpop.f32.mrf.mxu0
    %v598 = vadd.f32 0.0, %v597
    %599 = vmatmul.bf16.gmra.mxu0 %v538
    %v600 = vpop.f32.mrf.mxu0
    %v601 = vadd.f32 0.0, %v600
    %v602 = vpop.f32.mrf.mxu0
    %v603 = vadd.f32 0.0, %v602
    %604 = vmatmul.bf16.gmra.mxu0 %v541
    %v605 = vpop.f32.mrf.mxu0
    %v606 = vadd.f32 0.0, %v605
    %v607 = vpop.f32.mrf.mxu0
    %v608 = vadd.f32 0.0, %v607
    %609 = vmatmul.bf16.gmra.mxu0 %v544
    %v610 = vpop.f32.mrf.mxu0
    %v611 = vadd.f32 0.0, %v610
    %v612 = vpop.f32.mrf.mxu0
    %v613 = vadd.f32 0.0, %v612
    %614 = vmatmul.bf16.gmra.mxu0 %v547
    %v615 = vpop.f32.mrf.mxu0
    %v616 = vadd.f32 0.0, %v615
    %v617 = vpop.f32.mrf.mxu0
    %v618 = vadd.f32 0.0, %v617
    %619 = vmatmul.bf16.gmra.mxu0 %v550
    %v620 = vpop.f32.mrf.mxu0
    %v621 = vadd.f32 0.0, %v620
    %v622 = vpop.f32.mrf.mxu0
    %v623 = vadd.f32 0.0, %v622
    %624 = vmatmul.bf16.gmra.mxu0 %v553
    %v625 = vpop.f32.mrf.mxu0
    %v626 = vadd.f32 0.0, %v625
    %v627 = vpop.f32.mrf.mxu0
    %v628 = vadd.f32 0.0, %v627
    %629 = vmatmul.bf16.gmra.mxu0 %v556
    %v630 = vpop.f32.mrf.mxu0
    %v631 = vadd.f32 0.0, %v630
    %v632 = vpop.f32.mrf.mxu0
    %v633 = vadd.f32 0.0, %v632
    %634 = vmatmul.bf16.gmra.mxu0 %v559
    %v635 = vpop.f32.mrf.mxu0
    %v636 = vadd.f32 0.0, %v635
    %v637 = vpop.f32.mrf.mxu0
    %v638 = vadd.f32 0.0, %v637
    %639 = vmatmul.bf16.gmra.mxu0 %v562
    %v640 = vpop.f32.mrf.mxu0
    %v641 = vadd.f32 0.0, %v640
    %v642 = vpop.f32.mrf.mxu0
    %v643 = vadd.f32 0.0, %v642
    %644 = vmatmul.bf16.gmra.mxu0 %v565
    %v645 = vpop.f32.mrf.mxu0
    %v646 = vadd.f32 0.0, %v645
    %v647 = vpop.f32.mrf.mxu0
    %v648 = vadd.f32 0.0, %v647
    %649 = vmatmul.bf16.gmra.mxu0 %v568
    %v650 = vpop.f32.mrf.mxu0
    %v651 = vadd.f32 0.0, %v650
    %v652 = vpop.f32.mrf.mxu0
    %v653 = vadd.f32 0.0, %v652
    %654 = vmatmul.bf16.gmra.mxu0 %v571
    %v655 = vpop.f32.mrf.mxu0
    %v656 = vadd.f32 0.0, %v655
    %v657 = vpop.f32.mrf.mxu0
    %v658 = vadd.f32 0.0, %v657
    %659 = vmatmul.bf16.gmra.mxu0 %v574
    %v660 = vpop.f32.mrf.mxu0
    %v661 = vadd.f32 0.0, %v660
    %v662 = vpop.f32.mrf.mxu0
    %v663 = vadd.f32 0.0, %v662
    %664 = vdwg.mxu0
    %665 = vmatpush.bf16.msra.mxu0 0
    %666 = vmatpush.bf16.msra.mxu0 0
    %667 = vmatpush.bf16.msra.mxu0 0
    %668 = vmatpush.bf16.msra.mxu0 0
    %669 = vmatpush.bf16.msra.mxu0 0
    %670 = vmatpush.bf16.msra.mxu0 0
    %671 = vmatpush.bf16.msra.mxu0 %v516
    %672 = vmatpush.bf16.msra.mxu0 %v512
    %673 = vmatmul.bf16.gmra.mxu0 %v529
    %v674 = vpop.f32.mrf.mxu0
    %v675 = vadd.f32 0.0, %v674
    %v676 = vpop.f32.mrf.mxu0
    %v677 = vadd.f32 0.0, %v676
    %678 = vmatmul.bf16.gmra.mxu0 %v532
    %v679 = vpop.f32.mrf.mxu0
    %v680 = vadd.f32 0.0, %v679
    %v681 = vpop.f32.mrf.mxu0
    %v682 = vadd.f32 0.0, %v681
    %683 = vmatmul.bf16.gmra.mxu0 %v535
    %v684 = vpop.f32.mrf.mxu0
    %v685 = vadd.f32 0.0, %v684
    %v686 = vpop.f32.mrf.mxu0
    %v687 = vadd.f32 0.0, %v686
    %688 = vmatmul.bf16.gmra.mxu0 %v538
    %v689 = vpop.f32.mrf.mxu0
    %v690 = vadd.f32 0.0, %v689
    %v691 = vpop.f32.mrf.mxu0
    %v692 = vadd.f32 0.0, %v691
    %693 = vmatmul.bf16.gmra.mxu0 %v541
    %v694 = vpop.f32.mrf.mxu0
    %v695 = vadd.f32 0.0, %v694
    %v696 = vpop.f32.mrf.mxu0
    %v697 = vadd.f32 0.0, %v696
    %698 = vmatmul.bf16.gmra.mxu0 %v544
    %v699 = vpop.f32.mrf.mxu0
    %v700 = vadd.f32 0.0, %v699
    %v701 = vpop.f32.mrf.mxu0
    %v702 = vadd.f32 0.0, %v701
    %703 = vmatmul.bf16.gmra.mxu0 %v547
    %v704 = vpop.f32.mrf.mxu0
    %v705 = vadd.f32 0.0, %v704
    %v706 = vpop.f32.mrf.mxu0
    %v707 = vadd.f32 0.0, %v706
    %708 = vmatmul.bf16.gmra.mxu0 %v550
    %v709 = vpop.f32.mrf.mxu0
    %v710 = vadd.f32 0.0, %v709
    %v711 = vpop.f32.mrf.mxu0
    %v712 = vadd.f32 0.0, %v711
    %713 = vmatmul.bf16.gmra.mxu0 %v553
    %v714 = vpop.f32.mrf.mxu0
    %v715 = vadd.f32 0.0, %v714
    %v716 = vpop.f32.mrf.mxu0
    %v717 = vadd.f32 0.0, %v716
    %718 = vmatmul.bf16.gmra.mxu0 %v556
    %v719 = vpop.f32.mrf.mxu0
    %v720 = vadd.f32 0.0, %v719
    %v721 = vpop.f32.mrf.mxu0
    %v722 = vadd.f32 0.0, %v721
    %723 = vmatmul.bf16.gmra.mxu0 %v559
    %v724 = vpop.f32.mrf.mxu0
    %v725 = vadd.f32 0.0, %v724
    %v726 = vpop.f32.mrf.mxu0
    %v727 = vadd.f32 0.0, %v726
    %728 = vmatmul.bf16.gmra.mxu0 %v562
    %v729 = vpop.f32.mrf.mxu0
    %v730 = vadd.f32 0.0, %v729
    %v731 = vpop.f32.mrf.mxu0
    %v732 = vadd.f32 0.0, %v731
    %733 = vmatmul.bf16.gmra.mxu0 %v565
    %v734 = vpop.f32.mrf.mxu0
    %v735 = vadd.f32 0.0, %v734
    %v736 = vpop.f32.mrf.mxu0
    %v737 = vadd.f32 0.0, %v736
    %738 = vmatmul.bf16.gmra.mxu0 %v568
    %v739 = vpop.f32.mrf.mxu0
    %v740 = vadd.f32 0.0, %v739
    %v741 = vpop.f32.mrf.mxu0
    %v742 = vadd.f32 0.0, %v741
    %743 = vmatmul.bf16.gmra.mxu0 %v571
    %v744 = vpop.f32.mrf.mxu0
    %v745 = vadd.f32 0.0, %v744
    %v746 = vpop.f32.mrf.mxu0
    %v747 = vadd.f32 0.0, %v746
    %748 = vmatmul.bf16.gmra.mxu0 %v574
    %v749 = vpop.f32.mrf.mxu0
    %v750 = vadd.f32 0.0, %v749
    %v751 = vpop.f32.mrf.mxu0
    %v752 = vadd.f32 0.0, %v751
    %753 = vdwg.mxu0
    %754 = vmatpush.bf16.msra.mxu0 0
    %755 = vmatpush.bf16.msra.mxu0 0
    %756 = vmatpush.bf16.msra.mxu0 0
    %757 = vmatpush.bf16.msra.mxu0 0
    %758 = vmatpush.bf16.msra.mxu0 0
    %759 = vmatpush.bf16.msra.mxu0 0
    %760 = vmatpush.bf16.msra.mxu0 %v517
    %761 = vmatpush.bf16.msra.mxu0 %v513
    %762 = vmatmul.bf16.gmra.mxu0 %v529
    %v763 = vpop.f32.mrf.mxu0
    %v764 = vadd.f32 0.0, %v763
    %v765 = vpop.f32.mrf.mxu0
    %v766 = vadd.f32 0.0, %v765
    %767 = vmatmul.bf16.gmra.mxu0 %v532
    %v768 = vpop.f32.mrf.mxu0
    %v769 = vadd.f32 0.0, %v768
    %v770 = vpop.f32.mrf.mxu0
    %v771 = vadd.f32 0.0, %v770
    %772 = vmatmul.bf16.gmra.mxu0 %v535
    %v773 = vpop.f32.mrf.mxu0
    %v774 = vadd.f32 0.0, %v773
    %v775 = vpop.f32.mrf.mxu0
    %v776 = vadd.f32 0.0, %v775
    %777 = vmatmul.bf16.gmra.mxu0 %v538
    %v778 = vpop.f32.mrf.mxu0
    %v779 = vadd.f32 0.0, %v778
    %v780 = vpop.f32.mrf.mxu0
    %v781 = vadd.f32 0.0, %v780
    %782 = vmatmul.bf16.gmra.mxu0 %v541
    %v783 = vpop.f32.mrf.mxu0
    %v784 = vadd.f32 0.0, %v783
    %v785 = vpop.f32.mrf.mxu0
    %v786 = vadd.f32 0.0, %v785
    %787 = vmatmul.bf16.gmra.mxu0 %v544
    %v788 = vpop.f32.mrf.mxu0
    %v789 = vadd.f32 0.0, %v788
    %v790 = vpop.f32.mrf.mxu0
    %v791 = vadd.f32 0.0, %v790
    %792 = vmatmul.bf16.gmra.mxu0 %v547
    %v793 = vpop.f32.mrf.mxu0
    %v794 = vadd.f32 0.0, %v793
    %v795 = vpop.f32.mrf.mxu0
    %v796 = vadd.f32 0.0, %v795
    %797 = vmatmul.bf16.gmra.mxu0 %v550
    %v798 = vpop.f32.mrf.mxu0
    %v799 = vadd.f32 0.0, %v798
    %v800 = vpop.f32.mrf.mxu0
    %v801 = vadd.f32 0.0, %v800
    %802 = vmatmul.bf16.gmra.mxu0 %v553
    %v803 = vpop.f32.mrf.mxu0
    %v804 = vadd.f32 0.0, %v803
    %v805 = vpop.f32.mrf.mxu0
    %v806 = vadd.f32 0.0, %v805
    %807 = vmatmul.bf16.gmra.mxu0 %v556
    %v808 = vpop.f32.mrf.mxu0
    %v809 = vadd.f32 0.0, %v808
    %v810 = vpop.f32.mrf.mxu0
    %v811 = vadd.f32 0.0, %v810
    %812 = vmatmul.bf16.gmra.mxu0 %v559
    %v813 = vpop.f32.mrf.mxu0
    %v814 = vadd.f32 0.0, %v813
    %v815 = vpop.f32.mrf.mxu0
    %v816 = vadd.f32 0.0, %v815
    %817 = vmatmul.bf16.gmra.mxu0 %v562
    %v818 = vpop.f32.mrf.mxu0
    %v819 = vadd.f32 0.0, %v818
    %v820 = vpop.f32.mrf.mxu0
    %v821 = vadd.f32 0.0, %v820
    %822 = vmatmul.bf16.gmra.mxu0 %v565
    %v823 = vpop.f32.mrf.mxu0
    %v824 = vadd.f32 0.0, %v823
    %v825 = vpop.f32.mrf.mxu0
    %v826 = vadd.f32 0.0, %v825
    %827 = vmatmul.bf16.gmra.mxu0 %v568
    %v828 = vpop.f32.mrf.mxu0
    %v829 = vadd.f32 0.0, %v828
    %v830 = vpop.f32.mrf.mxu0
    %v831 = vadd.f32 0.0, %v830
    %832 = vmatmul.bf16.gmra.mxu0 %v571
    %v833 = vpop.f32.mrf.mxu0
    %v834 = vadd.f32 0.0, %v833
    %v835 = vpop.f32.mrf.mxu0
    %v836 = vadd.f32 0.0, %v835
    %837 = vmatmul.bf16.gmra.mxu0 %v574
    %v838 = vpop.f32.mrf.mxu0
    %v839 = vadd.f32 0.0, %v838
    %v840 = vpop.f32.mrf.mxu0
    %v841 = vadd.f32 0.0, %v840
    %842 = vdwg.mxu0
    %843 = vmatpush.bf16.msra.mxu0 0
    %844 = vmatpush.bf16.msra.mxu0 0
    %845 = vmatpush.bf16.msra.mxu0 0
    %846 = vmatpush.bf16.msra.mxu0 0
    %847 = vmatpush.bf16.msra.mxu0 0
    %848 = vmatpush.bf16.msra.mxu0 0
    %849 = vmatpush.bf16.msra.mxu0 %v518
    %850 = vmatpush.bf16.msra.mxu0 %v514
    %851 = vmatmul.bf16.gmra.mxu0 %v529
    %v852 = vpop.f32.mrf.mxu0
    %v853 = vadd.f32 0.0, %v852
    %v854 = vpop.f32.mrf.mxu0
    %v855 = vadd.f32 0.0, %v854
    %856 = vmatmul.bf16.gmra.mxu0 %v532
    %v857 = vpop.f32.mrf.mxu0
    %v858 = vadd.f32 0.0, %v857
    %v859 = vpop.f32.mrf.mxu0
    %v860 = vadd.f32 0.0, %v859
    %861 = vmatmul.bf16.gmra.mxu0 %v535
    %v862 = vpop.f32.mrf.mxu0
    %v863 = vadd.f32 0.0, %v862
    %v864 = vpop.f32.mrf.mxu0
    %v865 = vadd.f32 0.0, %v864
    %866 = vmatmul.bf16.gmra.mxu0 %v538
    %v867 = vpop.f32.mrf.mxu0
    %v868 = vadd.f32 0.0, %v867
    %v869 = vpop.f32.mrf.mxu0
    %v870 = vadd.f32 0.0, %v869
    %871 = vmatmul.bf16.gmra.mxu0 %v541
    %v872 = vpop.f32.mrf.mxu0
    %v873 = vadd.f32 0.0, %v872
    %v874 = vpop.f32.mrf.mxu0
    %v875 = vadd.f32 0.0, %v874
    %876 = vmatmul.bf16.gmra.mxu0 %v544
    %v877 = vpop.f32.mrf.mxu0
    %v878 = vadd.f32 0.0, %v877
    %v879 = vpop.f32.mrf.mxu0
    %v880 = vadd.f32 0.0, %v879
    %881 = vmatmul.bf16.gmra.mxu0 %v547
    %v882 = vpop.f32.mrf.mxu0
    %v883 = vadd.f32 0.0, %v882
    %v884 = vpop.f32.mrf.mxu0
    %v885 = vadd.f32 0.0, %v884
    %886 = vmatmul.bf16.gmra.mxu0 %v550
    %v887 = vpop.f32.mrf.mxu0
    %v888 = vadd.f32 0.0, %v887
    %v889 = vpop.f32.mrf.mxu0
    %v890 = vadd.f32 0.0, %v889
    %891 = vmatmul.bf16.gmra.mxu0 %v553
    %v892 = vpop.f32.mrf.mxu0
    %v893 = vadd.f32 0.0, %v892
    %v894 = vpop.f32.mrf.mxu0
    %v895 = vadd.f32 0.0, %v894
    %896 = vmatmul.bf16.gmra.mxu0 %v556
    %v897 = vpop.f32.mrf.mxu0
    %v898 = vadd.f32 0.0, %v897
    %v899 = vpop.f32.mrf.mxu0
    %v900 = vadd.f32 0.0, %v899
    %901 = vmatmul.bf16.gmra.mxu0 %v559
    %v902 = vpop.f32.mrf.mxu0
    %v903 = vadd.f32 0.0, %v902
    %v904 = vpop.f32.mrf.mxu0
    %v905 = vadd.f32 0.0, %v904
    %906 = vmatmul.bf16.gmra.mxu0 %v562
    %v907 = vpop.f32.mrf.mxu0
    %v908 = vadd.f32 0.0, %v907
    %v909 = vpop.f32.mrf.mxu0
    %v910 = vadd.f32 0.0, %v909
    %911 = vmatmul.bf16.gmra.mxu0 %v565
    %v912 = vpop.f32.mrf.mxu0
    %v913 = vadd.f32 0.0, %v912
    %v914 = vpop.f32.mrf.mxu0
    %v915 = vadd.f32 0.0, %v914
    %916 = vmatmul.bf16.gmra.mxu0 %v568
    %v917 = vpop.f32.mrf.mxu0
    %v918 = vadd.f32 0.0, %v917
    %v919 = vpop.f32.mrf.mxu0
    %v920 = vadd.f32 0.0, %v919
    %921 = vmatmul.bf16.gmra.mxu0 %v571
    %v922 = vpop.f32.mrf.mxu0
    %v923 = vadd.f32 0.0, %v922
    %v924 = vpop.f32.mrf.mxu0
    %v925 = vadd.f32 0.0, %v924
    %926 = vmatmul.bf16.gmra.mxu0 %v574
    %v927 = vpop.f32.mrf.mxu0
    %v928 = vadd.f32 0.0, %v927
    %v929 = vpop.f32.mrf.mxu0
    %v930 = vadd.f32 0.0, %v929
    %931 = vdwg.mxu0
    %v932 = vmax.f32 %v586, 0.0
    %v933 = vmax.f32 %v675, 0.0
    %v934 = vmax.f32 %v764, 0.0
    %v935 = vmax.f32 %v853, 0.0
    %v936 = vmax.f32 %v588, 0.0
    %v937 = vmax.f32 %v677, 0.0
    %v938 = vmax.f32 %v766, 0.0
    %v939 = vmax.f32 %v855, 0.0
    %v940 = vmax.f32 %v591, 0.0
    %v941 = vmax.f32 %v680, 0.0
    %v942 = vmax.f32 %v769, 0.0
    %v943 = vmax.f32 %v858, 0.0
    %v944 = vmax.f32 %v593, 0.0
    %v945 = vmax.f32 %v682, 0.0
    %v946 = vmax.f32 %v771, 0.0
    %v947 = vmax.f32 %v860, 0.0
    %v948 = vmax.f32 %v596, 0.0
    %v949 = vmax.f32 %v685, 0.0
    %v950 = vmax.f32 %v774, 0.0
    %v951 = vmax.f32 %v863, 0.0
    %v952 = vmax.f32 %v598, 0.0
    %v953 = vmax.f32 %v687, 0.0
    %v954 = vmax.f32 %v776, 0.0
    %v955 = vmax.f32 %v865, 0.0
    %v956 = vmax.f32 %v601, 0.0
    %v957 = vmax.f32 %v690, 0.0
    %v958 = vmax.f32 %v779, 0.0
    %v959 = vmax.f32 %v868, 0.0
    %v960 = vmax.f32 %v603, 0.0
    %v961 = vmax.f32 %v692, 0.0
    %v962 = vmax.f32 %v781, 0.0
    %v963 = vmax.f32 %v870, 0.0
    %v964 = vmax.f32 %v606, 0.0
    %v965 = vmax.f32 %v695, 0.0
    %v966 = vmax.f32 %v784, 0.0
    %v967 = vmax.f32 %v873, 0.0
    %v968 = vmax.f32 %v608, 0.0
    %v969 = vmax.f32 %v697, 0.0
    %v970 = vmax.f32 %v786, 0.0
    %v971 = vmax.f32 %v875, 0.0
    %v972 = vmax.f32 %v611, 0.0
    %v973 = vmax.f32 %v700, 0.0
    %v974 = vmax.f32 %v789, 0.0
    %v975 = vmax.f32 %v878, 0.0
    %v976 = vmax.f32 %v613, 0.0
    %v977 = vmax.f32 %v702, 0.0
    %v978 = vmax.f32 %v791, 0.0
    %v979 = vmax.f32 %v880, 0.0
    %v980 = vmax.f32 %v616, 0.0
    %v981 = vmax.f32 %v705, 0.0
    %v982 = vmax.f32 %v794, 0.0
    %v983 = vmax.f32 %v883, 0.0
    %v984 = vmax.f32 %v618, 0.0
    %v985 = vmax.f32 %v707, 0.0
    %v986 = vmax.f32 %v796, 0.0
    %v987 = vmax.f32 %v885, 0.0
    %v988 = vmax.f32 %v621, 0.0
    %v989 = vmax.f32 %v710, 0.0
    %v990 = vmax.f32 %v799, 0.0
    %v991 = vmax.f32 %v888, 0.0
    %v992 = vmax.f32 %v623, 0.0
    %v993 = vmax.f32 %v712, 0.0
    %v994 = vmax.f32 %v801, 0.0
    %v995 = vmax.f32 %v890, 0.0
    %v996 = vmax.f32 %v626, 0.0
    %v997 = vmax.f32 %v715, 0.0
    %v998 = vmax.f32 %v804, 0.0
    %v999 = vmax.f32 %v893, 0.0
    %v1000 = vmax.f32 %v628, 0.0
    %v1001 = vmax.f32 %v717, 0.0
    %v1002 = vmax.f32 %v806, 0.0
    %v1003 = vmax.f32 %v895, 0.0
    %v1004 = vmax.f32 %v631, 0.0
    %v1005 = vmax.f32 %v720, 0.0
    %v1006 = vmax.f32 %v809, 0.0
    %v1007 = vmax.f32 %v898, 0.0
    %v1008 = vmax.f32 %v633, 0.0
    %v1009 = vmax.f32 %v722, 0.0
    %v1010 = vmax.f32 %v811, 0.0
    %v1011 = vmax.f32 %v900, 0.0
    %v1012 = vmax.f32 %v636, 0.0
    %v1013 = vmax.f32 %v725, 0.0
    %v1014 = vmax.f32 %v814, 0.0
    %v1015 = vmax.f32 %v903, 0.0
    %v1016 = vmax.f32 %v638, 0.0
    %v1017 = vmax.f32 %v727, 0.0
    %v1018 = vmax.f32 %v816, 0.0
    %v1019 = vmax.f32 %v905, 0.0
    %v1020 = vmax.f32 %v641, 0.0
    %v1021 = vmax.f32 %v730, 0.0
    %v1022 = vmax.f32 %v819, 0.0
    %v1023 = vmax.f32 %v908, 0.0
    %v1024 = vmax.f32 %v643, 0.0
    %v1025 = vmax.f32 %v732, 0.0
    %v1026 = vmax.f32 %v821, 0.0
    %v1027 = vmax.f32 %v910, 0.0
    %v1028 = vmax.f32 %v646, 0.0
    %v1029 = vmax.f32 %v735, 0.0
    %v1030 = vmax.f32 %v824, 0.0
    %v1031 = vmax.f32 %v913, 0.0
    %v1032 = vmax.f32 %v648, 0.0
    %v1033 = vmax.f32 %v737, 0.0
    %v1034 = vmax.f32 %v826, 0.0
    %v1035 = vmax.f32 %v915, 0.0
    %v1036 = vmax.f32 %v651, 0.0
    %v1037 = vmax.f32 %v740, 0.0
    %v1038 = vmax.f32 %v829, 0.0
    %v1039 = vmax.f32 %v918, 0.0
    %v1040 = vmax.f32 %v653, 0.0
    %v1041 = vmax.f32 %v742, 0.0
    %v1042 = vmax.f32 %v831, 0.0
    %v1043 = vmax.f32 %v920, 0.0
    %v1044 = vmax.f32 %v656, 0.0
    %v1045 = vmax.f32 %v745, 0.0
    %v1046 = vmax.f32 %v834, 0.0
    %v1047 = vmax.f32 %v923, 0.0
    %v1048 = vmax.f32 %v658, 0.0
    %v1049 = vmax.f32 %v747, 0.0
    %v1050 = vmax.f32 %v836, 0.0
    %v1051 = vmax.f32 %v925, 0.0
    %v1052 = vmax.f32 %v661, 0.0
    %v1053 = vmax.f32 %v750, 0.0
    %v1054 = vmax.f32 %v839, 0.0
    %v1055 = vmax.f32 %v928, 0.0
    %v1056 = vmax.f32 %v663, 0.0
    %v1057 = vmax.f32 %v752, 0.0
    %v1058 = vmax.f32 %v841, 0.0
    %v1059 = vmax.f32 %v930, 0.0
    %1060 = vst [vmem:[#allocation3] sm:$0xff] %v932
    %1061 = vst [vmem:[#allocation3 + $0x8] sm:$0xff] %v933
    %1062 = vst [vmem:[#allocation3 + $0x10] sm:$0xff] %v934
    %1063 = vst [vmem:[#allocation3 + $0x18] sm:$0xff] %v935
    %1064 = vst [vmem:[#allocation3 + $0x20] sm:$0xff] %v936
    %1065 = vst [vmem:[#allocation3 + $0x28] sm:$0xff] %v937
    %1066 = vst [vmem:[#allocation3 + $0x30] sm:$0xff] %v938
    %1067 = vst [vmem:[#allocation3 + $0x38] sm:$0xff] %v939
    %1068 = vst [vmem:[#allocation3 + $0x40] sm:$0xff] %v940
    %1069 = vst [vmem:[#allocation3 + $0x48] sm:$0xff] %v941
    %1070 = vst [vmem:[#allocation3 + $0x50] sm:$0xff] %v942
    %1071 = vst [vmem:[#allocation3 + $0x58] sm:$0xff] %v943
    %1072 = vst [vmem:[#allocation3 + $0x60] sm:$0xff] %v944
    %1073 = vst [vmem:[#allocation3 + $0x68] sm:$0xff] %v945
    %1074 = vst [vmem:[#allocation3 + $0x70] sm:$0xff] %v946
    %1075 = vst [vmem:[#allocation3 + $0x78] sm:$0xff] %v947
    %1076 = vst [vmem:[#allocation3 + $0x80] sm:$0xff] %v948
    %1077 = vst [vmem:[#allocation3 + $0x88] sm:$0xff] %v949
    %1078 = vst [vmem:[#allocation3 + $0x90] sm:$0xff] %v950
    %1079 = vst [vmem:[#allocation3 + $0x98] sm:$0xff] %v951
    %1080 = vst [vmem:[#allocation3 + $0xa0] sm:$0xff] %v952
    %1081 = vst [vmem:[#allocation3 + $0xa8] sm:$0xff] %v953
    %1082 = vst [vmem:[#allocation3 + $0xb0] sm:$0xff] %v954
    %1083 = vst [vmem:[#allocation3 + $0xb8] sm:$0xff] %v955
    %1084 = vst [vmem:[#allocation3 + $0xc0] sm:$0xff] %v956
    %1085 = vst [vmem:[#allocation3 + $0xc8] sm:$0xff] %v957
    %1086 = vst [vmem:[#allocation3 + $0xd0] sm:$0xff] %v958
    %1087 = vst [vmem:[#allocation3 + $0xd8] sm:$0xff] %v959
    %1088 = vst [vmem:[#allocation3 + $0xe0] sm:$0xff] %v960
    %1089 = vst [vmem:[#allocation3 + $0xe8] sm:$0xff] %v961
    %1090 = vst [vmem:[#allocation3 + $0xf0] sm:$0xff] %v962
    %1091 = vst [vmem:[#allocation3 + $0xf8] sm:$0xff] %v963
    %1092 = vst [vmem:[#allocation3 + $0x100] sm:$0xff] %v964
    %1093 = vst [vmem:[#allocation3 + $0x108] sm:$0xff] %v965
    %1094 = vst [vmem:[#allocation3 + $0x110] sm:$0xff] %v966
    %1095 = vst [vmem:[#allocation3 + $0x118] sm:$0xff] %v967
    %1096 = vst [vmem:[#allocation3 + $0x120] sm:$0xff] %v968
    %1097 = vst [vmem:[#allocation3 + $0x128] sm:$0xff] %v969
    %1098 = vst [vmem:[#allocation3 + $0x130] sm:$0xff] %v970
    %1099 = vst [vmem:[#allocation3 + $0x138] sm:$0xff] %v971
    %1100 = vst [vmem:[#allocation3 + $0x140] sm:$0xff] %v972
    %1101 = vst [vmem:[#allocation3 + $0x148] sm:$0xff] %v973
    %1102 = vst [vmem:[#allocation3 + $0x150] sm:$0xff] %v974
    %1103 = vst [vmem:[#allocation3 + $0x158] sm:$0xff] %v975
    %1104 = vst [vmem:[#allocation3 + $0x160] sm:$0xff] %v976
    %1105 = vst [vmem:[#allocation3 + $0x168] sm:$0xff] %v977
    %1106 = vst [vmem:[#allocation3 + $0x170] sm:$0xff] %v978
    %1107 = vst [vmem:[#allocation3 + $0x178] sm:$0xff] %v979
    %1108 = vst [vmem:[#allocation3 + $0x180] sm:$0xff] %v980
    %1109 = vst [vmem:[#allocation3 + $0x188] sm:$0xff] %v981
    %1110 = vst [vmem:[#allocation3 + $0x190] sm:$0xff] %v982
    %1111 = vst [vmem:[#allocation3 + $0x198] sm:$0xff] %v983
    %1112 = vst [vmem:[#allocation3 + $0x1a0] sm:$0xff] %v984
    %1113 = vst [vmem:[#allocation3 + $0x1a8] sm:$0xff] %v985
    %1114 = vst [vmem:[#allocation3 + $0x1b0] sm:$0xff] %v986
    %1115 = vst [vmem:[#allocation3 + $0x1b8] sm:$0xff] %v987
    %1116 = vst [vmem:[#allocation3 + $0x1c0] sm:$0xff] %v988
    %1117 = vst [vmem:[#allocation3 + $0x1c8] sm:$0xff] %v989
    %1118 = vst [vmem:[#allocation3 + $0x1d0] sm:$0xff] %v990
    %1119 = vst [vmem:[#allocation3 + $0x1d8] sm:$0xff] %v991
    %1120 = vst [vmem:[#allocation3 + $0x1e0] sm:$0xff] %v992
    %1121 = vst [vmem:[#allocation3 + $0x1e8] sm:$0xff] %v993
    %1122 = vst [vmem:[#allocation3 + $0x1f0] sm:$0xff] %v994
    %1123 = vst [vmem:[#allocation3 + $0x1f8] sm:$0xff] %v995
    %1124 = vst [vmem:[#allocation3 + $0x200] sm:$0xff] %v996
    %1125 = vst [vmem:[#allocation3 + $0x208] sm:$0xff] %v997
    %1126 = vst [vmem:[#allocation3 + $0x210] sm:$0xff] %v998
    %1127 = vst [vmem:[#allocation3 + $0x218] sm:$0xff] %v999
    %1128 = vst [vmem:[#allocation3 + $0x220] sm:$0xff] %v1000
    %1129 = vst [vmem:[#allocation3 + $0x228] sm:$0xff] %v1001
    %1130 = vst [vmem:[#allocation3 + $0x230] sm:$0xff] %v1002
    %1131 = vst [vmem:[#allocation3 + $0x238] sm:$0xff] %v1003
    %1132 = vst [vmem:[#allocation3 + $0x240] sm:$0xff] %v1004
    %1133 = vst [vmem:[#allocation3 + $0x248] sm:$0xff] %v1005
    %1134 = vst [vmem:[#allocation3 + $0x250] sm:$0xff] %v1006
    %1135 = vst [vmem:[#allocation3 + $0x258] sm:$0xff] %v1007
    %1136 = vst [vmem:[#allocation3 + $0x260] sm:$0xff] %v1008
    %1137 = vst [vmem:[#allocation3 + $0x268] sm:$0xff] %v1009
    %1138 = vst [vmem:[#allocation3 + $0x270] sm:$0xff] %v1010
    %1139 = vst [vmem:[#allocation3 + $0x278] sm:$0xff] %v1011
    %1140 = vst [vmem:[#allocation3 + $0x280] sm:$0xff] %v1012
    %1141 = vst [vmem:[#allocation3 + $0x288] sm:$0xff] %v1013
    %1142 = vst [vmem:[#allocation3 + $0x290] sm:$0xff] %v1014
    %1143 = vst [vmem:[#allocation3 + $0x298] sm:$0xff] %v1015
    %1144 = vst [vmem:[#allocation3 + $0x2a0] sm:$0xff] %v1016
    %1145 = vst [vmem:[#allocation3 + $0x2a8] sm:$0xff] %v1017
    %1146 = vst [vmem:[#allocation3 + $0x2b0] sm:$0xff] %v1018
    %1147 = vst [vmem:[#allocation3 + $0x2b8] sm:$0xff] %v1019
    %1148 = vst [vmem:[#allocation3 + $0x2c0] sm:$0xff] %v1020
    %1149 = vst [vmem:[#allocation3 + $0x2c8] sm:$0xff] %v1021
    %1150 = vst [vmem:[#allocation3 + $0x2d0] sm:$0xff] %v1022
    %1151 = vst [vmem:[#allocation3 + $0x2d8] sm:$0xff] %v1023
    %1152 = vst [vmem:[#allocation3 + $0x2e0] sm:$0xff] %v1024
    %1153 = vst [vmem:[#allocation3 + $0x2e8] sm:$0xff] %v1025
    %1154 = vst [vmem:[#allocation3 + $0x2f0] sm:$0xff] %v1026
    %1155 = vst [vmem:[#allocation3 + $0x2f8] sm:$0xff] %v1027
    %1156 = vst [vmem:[#allocation3 + $0x300] sm:$0xff] %v1028
    %1157 = vst [vmem:[#allocation3 + $0x308] sm:$0xff] %v1029
    %1158 = vst [vmem:[#allocation3 + $0x310] sm:$0xff] %v1030
    %1159 = vst [vmem:[#allocation3 + $0x318] sm:$0xff] %v1031
    %1160 = vst [vmem:[#allocation3 + $0x320] sm:$0xff] %v1032
    %1161 = vst [vmem:[#allocation3 + $0x328] sm:$0xff] %v1033
    %1162 = vst [vmem:[#allocation3 + $0x330] sm:$0xff] %v1034
    %1163 = vst [vmem:[#allocation3 + $0x338] sm:$0xff] %v1035
    %1164 = vst [vmem:[#allocation3 + $0x340] sm:$0xff] %v1036
    %1165 = vst [vmem:[#allocation3 + $0x348] sm:$0xff] %v1037
    %1166 = vst [vmem:[#allocation3 + $0x350] sm:$0xff] %v1038
    %1167 = vst [vmem:[#allocation3 + $0x358] sm:$0xff] %v1039
    %1168 = vst [vmem:[#allocation3 + $0x360] sm:$0xff] %v1040
    %1169 = vst [vmem:[#allocation3 + $0x368] sm:$0xff] %v1041
    %1170 = vst [vmem:[#allocation3 + $0x370] sm:$0xff] %v1042
    %1171 = vst [vmem:[#allocation3 + $0x378] sm:$0xff] %v1043
    %1172 = vst [vmem:[#allocation3 + $0x380] sm:$0xff] %v1044
    %1173 = vst [vmem:[#allocation3 + $0x388] sm:$0xff] %v1045
    %1174 = vst [vmem:[#allocation3 + $0x390] sm:$0xff] %v1046
    %1175 = vst [vmem:[#allocation3 + $0x398] sm:$0xff] %v1047
    %1176 = vst [vmem:[#allocation3 + $0x3a0] sm:$0xff] %v1048
    %1177 = vst [vmem:[#allocation3 + $0x3a8] sm:$0xff] %v1049
    %1178 = vst [vmem:[#allocation3 + $0x3b0] sm:$0xff] %v1050
    %1179 = vst [vmem:[#allocation3 + $0x3b8] sm:$0xff] %v1051
    %1180 = vst [vmem:[#allocation3 + $0x3c0] sm:$0xff] %v1052
    %1181 = vst [vmem:[#allocation3 + $0x3c8] sm:$0xff] %v1053
    %1182 = vst [vmem:[#allocation3 + $0x3d0] sm:$0xff] %v1054
    %1183 = vst [vmem:[#allocation3 + $0x3d8] sm:$0xff] %v1055
    %1184 = vst [vmem:[#allocation3 + $0x3e0] sm:$0xff] %v1056
    %1185 = vst [vmem:[#allocation3 + $0x3e8] sm:$0xff] %v1057
    %1186 = vst [vmem:[#allocation3 + $0x3f0] sm:$0xff] %v1058
    %1187 = vst [vmem:[#allocation3 + $0x3f8] sm:$0xff] %v1059
    // Predicated region
    $region18: #{graph_convolution.1} parent=1 // pred_check
      _
    $region19: #{graph_convolution.1} parent=1 // pred_check_branch
      %1189 = sbr.rel (0) target = $region21
    $region20: #{graph_convolution.1} parent=1 // pred_region
      %1191 = vsyncadd [#allocation4], 0
      %s1192 = sshll.u32 [#allocation3], 4
      %s1193 = int_to_ptr.vmem [resolvable:$true] %s1192
      %s1194 = sshll.u32 %s3, 4
      %s1195 = int_to_ptr.hbm [resolvable:$true] %s1194
      %1200 = dma.vmem_to_hbm [thread:$0]  %s1193, 16384, %s1195, [#allocation4], 512, 512, 32
    $region21: #{graph_convolution.1} parent=1 // pred_fallthru
      _
    // Predicated region
    $region22: #{graph_convolution.1} parent=1 // pred_check
      _
    $region23: #{graph_convolution.1} parent=1 // pred_check_branch
      %1202 = sbr.rel (0) target = $region25
    $region24: #{graph_convolution.1} parent=1 // pred_region
      %1204 = dma.done [#allocation4], 16384
    $region25: #{graph_convolution.1} parent=1 // pred_fallthru
      _
    %1205 = vsyncpa [#allocation4], 1

</llo_original>
